<compile_context>
chip_gen: v6e
topology: v6e:2x2x1
jax: 0.10.0
libtpu: 0.0.40
codegen_flags: <defaults>
</compile_context>

<pallas_src>
import functools

import jax
import jax.numpy as jnp
import numpy as np
from jax.experimental import pallas as pl
from jax.experimental.pallas import tpu as pltpu


# ---------------------------------------------------------------------------
# Hierarchy bookkeeping (pure Python, mirrors the PyTorch helper exactly)
# ---------------------------------------------------------------------------
def get_hierarchy_relations(label_map):
    hierar_relations = {}
    for key, value in label_map.items():
        label_layer = key.split('.')
        if len(label_layer) == 1:
            hierar_relations[value] = []
        elif len(label_layer) == 2:
            my_father = label_map[label_layer[0]]
            hierar_relations[my_father].append(value)
            hierar_relations[value] = []
        elif len(label_layer) == 3:
            my_father = label_map[label_layer[0] + '.' + label_layer[1]]
            hierar_relations[my_father].append(value)
            hierar_relations[value] = []
        elif len(label_layer) == 4:
            my_father = label_map[label_layer[0] + '.' + label_layer[1] + '.' + label_layer[2]]
            hierar_relations[my_father].append(value)
    return hierar_relations


def build_parent_child_pairs(label_map, num_labels):
    """Replicates _recursive_regularization's loop: parents i in range(num_labels),
    break when i + 1 >= father_num; each (parent, child) contributes
    0.5 * ||params[parent] - params[child]||^2."""
    relations = get_hierarchy_relations(label_map)
    father_num = len(relations)
    parents, children = [], []
    for i in range(num_labels):
        if i + 1 >= father_num:
            break
        for c in relations.get(i, []):
            parents.append(i)
            children.append(c)
    return np.asarray(parents, np.int32), np.asarray(children, np.int32)


# ---------------------------------------------------------------------------
# Pallas kernel: streamed BCE-with-logits partial column sums
# ---------------------------------------------------------------------------
def _bce_sum_kernel(x_ref, y_ref, out_ref, *, total_rows, block_rows):
    i = pl.program_id(0)

    @pl.when(i == 0)
    def _init():
        out_ref[...] = jnp.zeros_like(out_ref)

    x = x_ref[...].astype(jnp.float32)          # (block_rows, L)
    y = y_ref[...].astype(jnp.float32)
    # Numerically stable BCE-with-logits (same formulation torch uses):
    #   max(x, 0) - x*y + log(1 + exp(-|x|))
    bce = jnp.maximum(x, 0.0) - x * y + jnp.log1p(jnp.exp(-jnp.abs(x)))

    if total_rows % block_rows != 0:
        # Only the last grid step can be ragged (static decision); for earlier
        # steps the mask is all-true and the select is a no-op.
        row = jax.lax.broadcasted_iota(jnp.int32, bce.shape, 0)
        valid = total_rows - i * block_rows
        bce = jnp.where(row < valid, bce, 0.0)

    # Output block is resident across the whole (reduction) grid axis:
    # accumulate per-column partial sums; mean + penalty happen in the epilogue.
    out_ref[...] += jnp.sum(bce, axis=0, keepdims=True)


def _pick_block_rows(num_rows, num_cols):
    # ~8 MiB of combined logits+targets per grid step (double buffered ~16 MiB),
    # comfortably under the 32 MiB scoped-VMEM limit set below.
    target_bytes = 8 * 1024 * 1024
    bytes_per_row = 8 * max(1, num_cols)        # f32 logits + f32 targets
    rows = (target_bytes // bytes_per_row) // 8 * 8
    rows = max(8, rows)
    if rows >= num_rows:
        return num_rows                         # one block == full array dim (legal)
    return rows                                 # multiple of 8 (sublane constraint)


def classification_loss(logits, targets, recursive_params,
                        parent_idx, child_idx, *,
                        hierar_penalty, use_hierar_penalty):
    """JAX/Pallas equivalent of ClassificationLoss.forward (class_weight=None)."""
    B, L = logits.shape
    n = B * L

    tb = _pick_block_rows(B, L)
    grid = (pl.cdiv(B, tb),)

    kernel = functools.partial(_bce_sum_kernel, total_rows=B, block_rows=tb)

    data_spec = pl.BlockSpec((tb, L), lambda i: (i, 0))
    out_spec = pl.BlockSpec((1, L), lambda i: (0, 0))

    cost = pl.CostEstimate(
        flops=6 * n,
        transcendentals=2 * n,
        bytes_accessed=8 * n + 4 * L)

    col_sums = pl.pallas_call(
        kernel,
        out_shape=jax.ShapeDtypeStruct((1, L), jnp.float32),
        grid=grid,
        in_specs=[data_spec, data_spec],
        out_specs=out_spec,
        compiler_params=pltpu.CompilerParams(
            dimension_semantics=("arbitrary",),
            vmem_limit_bytes=32 * 1024 * 1024),
        cost_estimate=cost,
    )(logits, targets)

    # Tiny JAX epilogue: final cross-lane reduce + mean + hierarchical penalty.
    loss = jnp.sum(col_sums) / jnp.float32(n)

    parent_idx = jnp.asarray(parent_idx, jnp.int32)
    child_idx = jnp.asarray(child_idx, jnp.int32)
    if bool(use_hierar_penalty) and parent_idx.size > 0:
        p = jnp.take(recursive_params, parent_idx, axis=0).astype(jnp.float32)
        c = jnp.take(recursive_params, child_idx, axis=0).astype(jnp.float32)
        d = p - c
        loss = loss + jnp.float32(hierar_penalty) * 0.5 * jnp.sum(d * d)

    return loss


# ---------------------------------------------------------------------------
# Pure-JAX reference (sanity check only)
# ---------------------------------------------------------------------------
def reference_loss(logits, targets, params, parent_idx, child_idx,
                   hierar_penalty, use_hierar_penalty):
    x = logits.astype(jnp.float32)
    y = targets.astype(jnp.float32)
    bce = jnp.mean(jnp.maximum(x, 0.0) - x * y + jnp.log1p(jnp.exp(-jnp.abs(x))))
    if use_hierar_penalty and np.asarray(parent_idx).size > 0:
        d = params[jnp.asarray(parent_idx)] - params[jnp.asarray(child_idx)]
        bce = bce + hierar_penalty * 0.5 * jnp.sum(d * d)
    return bce


if __name__ == "__main__":
    # Synthetic hierarchical label map (depths 1..3), deterministic.
    label_map = {
        "cs": 0, "cs.ai": 1, "cs.ai.ml": 2, "cs.db": 3,
        "math": 4, "math.alg": 5, "math.geo": 6, "phy": 7,
    }
    num_labels = len(label_map)     # 8
    batch = 8
    hidden = 32
    hierar_penalty = 1e-2
    use_hierar_penalty = True

    parent_idx, child_idx = build_parent_child_pairs(label_map, num_labels)

    key = jax.random.PRNGKey(0)
    k_logits, k_targets, k_params = jax.random.split(key, 3)
    logits = jax.random.normal(k_logits, (batch, num_labels), dtype=jnp.float32)
    targets = jax.random.bernoulli(k_targets, 0.3, (batch, num_labels)).astype(jnp.float32)
    # Deterministically "initialized" classifier parameters (num_labels, hidden_dim).
    recursive_params = 0.1 * jax.random.normal(k_params, (num_labels, hidden), dtype=jnp.float32)

    loss = classification_loss(
        logits, targets, recursive_params, parent_idx, child_idx,
        hierar_penalty=hierar_penalty, use_hierar_penalty=use_hierar_penalty,
    )
    loss = jax.block_until_ready(loss)

    ref = reference_loss(logits, targets, recursive_params, parent_idx, child_idx,
                         hierar_penalty, use_hierar_penalty)
    np.testing.assert_allclose(np.asarray(loss), np.asarray(ref), rtol=1e-5, atol=1e-5)

    print("KERNEL_OK")
</pallas_src>

<mosaic_0001>
module attributes {stable_mosaic.version = 11 : i64} {
  func.func @_bce_sum_kernel(%arg0: i32, %arg1: memref<8x8xf32, #tpu.memory_space<vmem>>, %arg2: memref<8x8xf32, #tpu.memory_space<vmem>>, %arg3: memref<1x8xf32, #tpu.memory_space<vmem>>) attributes {dimension_semantics = [#tpu.dimension_semantics<arbitrary>], iteration_bounds = array<i64: 1>, scalar_prefetch = 0 : i64, scratch_operands = 0 : i64, tpu.core_type = #tpu.core_type<tc>, window_params = [{transform_indices = @transform_0, window_bounds = array<i64: 8, 8>}, {transform_indices = @transform_1, window_bounds = array<i64: 8, 8>}, {pipeline_mode = #tpu.pipeline_mode<synchronous>, transform_indices = @transform_2, window_bounds = array<i64: 1, 8>}]} {
    %c0_i32 = arith.constant 0 : i32
    %0 = arith.cmpi eq, %arg0, %c0_i32 : i32
    %1 = arith.extui %0 : i1 to i32
    %c0_i32_0 = arith.constant 0 : i32
    %2 = arith.cmpi ne, %1, %c0_i32_0 : i32
    scf.if %2 {
      %cst_10 = arith.constant 0.000000e+00 : f32
      %20 = vector.broadcast %cst_10 : f32 to vector<1x8xf32>
      %c0_11 = arith.constant 0 : index
      %c0_12 = arith.constant 0 : index
      %21 = vector.load %arg3[%c0_11, %c0_12] : memref<1x8xf32, #tpu.memory_space<vmem>>, vector<1x8xf32>
      tpu.vector_store %arg3[%c0_11, %c0_12], %20 {strides = array<i32>} : memref<1x8xf32, #tpu.memory_space<vmem>>, vector<1x8xf32>,
    } else {
    }
    %c0 = arith.constant 0 : index
    %c0_1 = arith.constant 0 : index
    %3 = vector.load %arg1[%c0, %c0_1] : memref<8x8xf32, #tpu.memory_space<vmem>>, vector<8x8xf32>
    %c0_2 = arith.constant 0 : index
    %c0_3 = arith.constant 0 : index
    %4 = vector.load %arg2[%c0_2, %c0_3] : memref<8x8xf32, #tpu.memory_space<vmem>>, vector<8x8xf32>
    %cst = arith.constant 0.000000e+00 : f32
    %5 = vector.broadcast %cst : f32 to vector<8x8xf32>
    %6 = arith.maximumf %3, %5 : vector<8x8xf32>
    %7 = arith.mulf %3, %4 : vector<8x8xf32>
    %8 = arith.subf %6, %7 : vector<8x8xf32>
    %9 = math.absf %3 : vector<8x8xf32>
    %cst_4 = arith.constant 0.000000e+00 : f32
    %10 = vector.broadcast %cst_4 : f32 to vector<8x8xf32>
    %11 = arith.subf %10, %9 : vector<8x8xf32>
    %12 = math.exp %11 : vector<8x8xf32>
    %13 = math.log1p %12 : vector<8x8xf32>
    %14 = arith.addf %8, %13 : vector<8x8xf32>
    %c0_5 = arith.constant 0 : index
    %c0_6 = arith.constant 0 : index
    %15 = vector.load %arg3[%c0_5, %c0_6] : memref<1x8xf32, #tpu.memory_space<vmem>>, vector<1x8xf32>
    %cst_7 = arith.constant dense<0.000000e+00> : vector<8xf32>
    %16 = vector.multi_reduction <add>, %14, %cst_7 [0] : vector<8x8xf32> to vector<8xf32>
    %17 = vector.shape_cast %16 : vector<8xf32> to vector<1x8xf32>
    %18 = arith.addf %15, %17 : vector<1x8xf32>
    %c0_8 = arith.constant 0 : index
    %c0_9 = arith.constant 0 : index
    %19 = vector.load %arg3[%c0_8, %c0_9] : memref<1x8xf32, #tpu.memory_space<vmem>>, vector<1x8xf32>
    tpu.vector_store %arg3[%c0_8, %c0_9], %18 {strides = array<i32>} : memref<1x8xf32, #tpu.memory_space<vmem>>, vector<1x8xf32>,
    return
  }
  func.func @transform_0(%arg0: i32) -> (i32, i32) {
    %c0_i32 = arith.constant 0 : i32
    %c0_i32_0 = arith.constant 0 : i32
    return %arg0, %c0_i32 : i32, i32
  }
  func.func @transform_1(%arg0: i32) -> (i32, i32) {
    %c0_i32 = arith.constant 0 : i32
    %c0_i32_0 = arith.constant 0 : i32
    return %arg0, %c0_i32 : i32, i32
  }
  func.func @transform_2(%arg0: i32) -> (i32, i32) {
    %c0_i32 = arith.constant 0 : i32
    %c0_i32_0 = arith.constant 0 : i32
    %c0_i32_1 = arith.constant 0 : i32
    return %c0_i32, %c0_i32_0 : i32, i32
  }
}

</mosaic_0001>

<llo_original>
// kernel: tpu_custom_call.1
$region0: #{tpu_custom_call.1}
  #allocation0 [shape = 'u32[]', space=smem, size = 0x4, offset = 0x4, fixed_abs, tag = 'smem constant byte address 0x4 - core index']
  #allocation1 [shape = 'u32[144,128]{1,0:T(1,128)}', space=vmem, size = 0x12000, scoped, tag = 'internal scratch']
  %s0 = inlined_call_operand.hbm [shape: f32[8,8], index: 0, kind: input, shape index: {}]
  %s1 = inlined_call_operand.hbm [shape: f32[8,8], index: 1, kind: input, shape index: {}]
  %s2 = inlined_call_operand.hbm [shape: f32[1,8], index: 2, kind: output, shape index: {}]
  %s3 = sld [smem:[#allocation0]]
  $region30: #{tpu_custom_call.1} parent=0
    _
  %s5 = ssub.s32 1, %s3
  %s6 = scalar_select 0, %s5, %s3
  $region1: #{tpu_custom_call.1} parent=0
    #allocation2 [shape = 'u8[4096]{0}', space=vmem, size = 0x1000, scoped, tag = 'input window, operand 0, single buffered']
    #allocation3 [shape = 's32[1]{0}', space=sflag, size = 0x4, scoped, tag = 'scoped memory for tpu_custom_call.1']
    #allocation4 [shape = 's32[1]{0}', space=sflag, size = 0x4, scoped, tag = 'scoped memory for tpu_custom_call.1']
    #allocation5 [shape = 'u8[4096]{0}', space=vmem, size = 0x1000, scoped, tag = 'input window, operand 1, single buffered']
    #allocation6 [shape = 's32[1]{0}', space=sflag, size = 0x4, scoped, tag = 'scoped memory for tpu_custom_call.1']
    #allocation7 [shape = 'u8[512]{0}', space=vmem, size = 0x400, scoped, tag = 'output window, operand 0, single buffered']
    %7 = vsyncpa [#allocation3], 0
    %8 = vsyncpa [#allocation6], 0
    %9 = vsyncpa [#allocation4], 0
    // Predicated region
    $region2: #{tpu_custom_call.1} parent=1 // pred_check
      _
    $region3: #{tpu_custom_call.1} parent=1 // pred_check_branch
      %11 = sbr.rel (0) target = $region5
    $region4: #{tpu_custom_call.1} parent=1 // pred_region
      %s13 = ssub.s32 128, 128
      %14 = vsyncadd [#allocation3], %s13
      %s16 = sshll.u32 [#allocation2], 4
      %s17 = int_to_ptr.vmem [resolvable:$true] %s16
      %19 = dma.hbm_to_vmem [thread:$0]  %s0, 128, %s17, [#allocation3]
    $region5: #{tpu_custom_call.1} parent=1 // pred_fallthru
      _
    // Predicated region
    $region6: #{tpu_custom_call.1} parent=1 // pred_check
      _
    $region7: #{tpu_custom_call.1} parent=1 // pred_check_branch
      %21 = sbr.rel (0) target = $region9
    $region8: #{tpu_custom_call.1} parent=1 // pred_region
      %s23 = ssub.s32 128, 128
      %24 = vsyncadd [#allocation6], %s23
      %s26 = sshll.u32 [#allocation5], 4
      %s27 = int_to_ptr.vmem [resolvable:$true] %s26
      %29 = dma.hbm_to_vmem [thread:$0]  %s1, 128, %s27, [#allocation6]
    $region9: #{tpu_custom_call.1} parent=1 // pred_fallthru
      _
    // Predicated region
    $region10: #{tpu_custom_call.1} parent=1 // pred_check
      _
    $region11: #{tpu_custom_call.1} parent=1 // pred_check_branch
      %31 = sbr.rel (0) target = $region13
    $region12: #{tpu_custom_call.1} parent=1 // pred_region
      %32 = dma.done [#allocation3], 128
    $region13: #{tpu_custom_call.1} parent=1 // pred_fallthru
      _
    // Predicated region
    $region14: #{tpu_custom_call.1} parent=1 // pred_check
      _
    $region15: #{tpu_custom_call.1} parent=1 // pred_check_branch
      %34 = sbr.rel (0) target = $region17
    $region16: #{tpu_custom_call.1} parent=1 // pred_region
      %35 = dma.done [#allocation6], 128
    $region17: #{tpu_custom_call.1} parent=1 // pred_fallthru
      _
    %p36 = scmp.eq.s32.totalorder 0, 0
    // Predicated region
    $region18: #{tpu_custom_call.1} parent=1 // pred_check
      %p37 = pneg %p36
    $region19: #{tpu_custom_call.1} parent=1 // pred_check_branch
      %39 = sbr.rel (%p37) target = $region21
    $region20: #{tpu_custom_call.1} parent=1 // pred_region
      %vm40 = vcmask 57344
      %41 = vst.msk [vmem:[#allocation7] sm:$0x1] %vm40, 0.0
    $region21: #{tpu_custom_call.1} parent=1 // pred_fallthru
      _
    %v42 = vld [vmem:[#allocation2] sm:$0xff]
    %v43 = vld [vmem:[#allocation5] sm:$0xff]
    %v44 = vmax.f32 %v42, 0.0
    %v45 = vmul.f32 %v42, %v43
    %v46 = vsub.f32 %v44, %v45
    %v47 = vand.u32 2147483647, %v42
    %v48 = vsub.f32 0.0, %v47
    %v49 = vmul.f32 %v48, 1.442695
    %v50 = vpow.pop %v49
    %v51 = vadd.f32 %v50, 1.0
    %v52 = vlog2.pop %v51
    %v53 = vmul.f32 %v52, 0.6931472
    %v54 = vmul.f32 -0.5, %v50
    %v55 = vadd.f32 %v54, 1.0
    %v56 = vmul.f32 %v55, %v50
    %v57 = vand.u32 2147483647, %v50
    %vm58 = vcmp.lt.f32.partialorder %v57, 0.0004427343
    %v59 = vsel %vm58, %v56, %v53
    %v60 = vadd.f32 %v46, %v59
    %v61 = vld [vmem:[#allocation7] sm:$0x1]
    %vm62 = vcmask 64512
    %v63 = vsel %vm62, %v60, 0.0
    %v64 = vrot.slane %v63, 4
    %v65 = vadd.f32 %v63, %v64
    %v66 = vrot.slane %v65, 2
    %v67 = vadd.f32 %v65, %v66
    %v68 = vrot.slane %v67, 1
    %v69 = vadd.f32 %v67, %v68
    %v70 = vadd.f32 %v61, %v69
    %vm71 = vcmask 57344
    %72 = vst.msk [vmem:[#allocation7] sm:$0x1] %vm71, %v70
    // Predicated region
    $region22: #{tpu_custom_call.1} parent=1 // pred_check
      _
    $region23: #{tpu_custom_call.1} parent=1 // pred_check_branch
      %74 = sbr.rel (0) target = $region25
    $region24: #{tpu_custom_call.1} parent=1 // pred_region
      %s76 = ssub.s32 16, 16
      %77 = vsyncadd [#allocation4], %s76
      %s79 = sshll.u32 [#allocation7], 4
      %s80 = int_to_ptr.vmem [resolvable:$true] %s79
      %82 = dma.vmem_to_hbm [thread:$0]  %s80, 16, %s2, [#allocation4]
    $region25: #{tpu_custom_call.1} parent=1 // pred_fallthru
      _
    // Predicated region
    $region26: #{tpu_custom_call.1} parent=1 // pred_check
      _
    $region27: #{tpu_custom_call.1} parent=1 // pred_check_branch
      %84 = sbr.rel (0) target = $region29
    $region28: #{tpu_custom_call.1} parent=1 // pred_region
      %85 = dma.done [#allocation4], 16
    $region29: #{tpu_custom_call.1} parent=1 // pred_fallthru
      _
    %86 = vsyncpa [#allocation3], 1
    %87 = vsyncpa [#allocation6], 1
    %88 = vsyncpa [#allocation4], 1

</llo_original>
